<compile_context>
chip_gen: v5e
topology: v5e:2x2
jax: 0.10.0
libtpu: 0.0.40
codegen_flags: <defaults>
</compile_context>

<pallas_src>
import functools
import math

import jax
import jax.numpy as jnp
from jax.experimental import pallas as pl
from jax.experimental.pallas import tpu as pltpu


LAMBD = 0.001  # module default


def _tv_mixture_kernel(lambd_over_e, c3_ref, c2_ref, loss_ref):
    """c3_ref: [H, H, E] view (i on the major dim, E on lanes).
    c2_ref: [H, H*E] view (j*E + e on lanes).
    loss_ref: (1, 1) f32 in SMEM.
    """
    h, _, e = c3_ref.shape
    acc = jnp.zeros((h, e), jnp.float32)

    # i-direction TV: |coef[i+1, j, :] - coef[i, j, :]|.  Major-dim indexing of
    # the 3-D view -> always tile-aligned, no relayout copies.
    prev = c3_ref[0].astype(jnp.float32)                      # [H, E]
    for i in range(1, h):
        cur = c3_ref[i].astype(jnp.float32)
        acc = acc + jnp.abs(cur - prev)                       # VPU only
        prev = cur

    # j-direction TV: |coef[i, j+1, :] - coef[i, j, :]|.  Lane-axis slices of
    # the 2-D view at offsets j*E (lane-tile aligned when E % 128 == 0).
    prev = c2_ref[:, 0:e].astype(jnp.float32)                 # [H, E]
    for j in range(1, h):
        cur = c2_ref[:, j * e:(j + 1) * e].astype(jnp.float32)
        acc = acc + jnp.abs(cur - prev)                       # VPU only
        prev = cur

    # Exactly one cross-lane (XLU) reduction, then the scalar SMEM store.
    loss_ref[0, 0] = jnp.float32(lambd_over_e) * jnp.sum(acc)


def tv_mixture_loss(batch, output, state, lambd=LAMBD):
    """Mirror of TVMixtureLoss.forward(batch, output, state) -> scalar loss."""
    coef = state.get("coef")
    if coef is None:
        return jnp.zeros((), dtype=output.dtype)
    pieces = [c for c in coef if c is not None]
    if not pieces:
        # torch.cat([]) would raise; be defensive and return zero.
        return jnp.zeros((), dtype=output.dtype)

    # Concat along E in the wrapper: cheap at these sizes and yields one
    # lane-dense input for the kernel (E_total = 128 in the demo).
    coef = jnp.concatenate(pieces, axis=1) if len(pieces) > 1 else pieces[0]
    n, e = coef.shape
    h = math.isqrt(n)
    assert h * h == n, "coef rows must form a square spatial grid"

    # Two zero-cost (contiguous, row-major) views of the same data.
    c3 = coef.reshape(h, h, e)       # i-direction view
    c2 = coef.reshape(h, h * e)      # j-direction view

    cost = pl.CostEstimate(
        flops=6 * (h - 1) * h * e,                       # sub+abs+add, 2 dirs
        transcendentals=0,
        bytes_accessed=2 * n * e * coef.dtype.itemsize + 4,
    )

    kernel = functools.partial(_tv_mixture_kernel, float(lambd) / float(e))
    loss = pl.pallas_call(
        kernel,
        out_shape=jax.ShapeDtypeStruct((1, 1), jnp.float32),
        in_specs=[
            pl.BlockSpec(memory_space=pltpu.MemorySpace.VMEM),
            pl.BlockSpec(memory_space=pltpu.MemorySpace.VMEM),
        ],
        out_specs=pl.BlockSpec(memory_space=pltpu.MemorySpace.SMEM),
        cost_estimate=cost,
    )(c3, c2)
    # torch's loss dtype follows coef (python-float scale keeps tensor dtype).
    return loss[0, 0].astype(coef.dtype)


if __name__ == "__main__":
    key = jax.random.PRNGKey(0)
    k0, k1, ko = jax.random.split(key, 3)

    H_, E0, E1 = 16, 64, 64          # N = 256 = 16*16, total E = 128 (lane-dense)
    N_ = H_ * H_
    coef_list = [
        jax.random.normal(k0, (N_, E0), jnp.float32),
        None,                                        # exercises the None filter
        jax.random.normal(k1, (N_, E1), jnp.float32),
    ]
    output = jax.random.normal(ko, (N_, 8), jnp.float32)   # only its dtype is used
    batch = {}
    state = {"coef": coef_list}

    loss = tv_mixture_loss(batch, output, state, lambd=LAMBD)
    loss = jax.block_until_ready(loss)

    # Pure-JAX reference (literal translation of the torch module).
    cat = jnp.concatenate([c for c in coef_list if c is not None], axis=1)
    E_ = cat.shape[1]
    c3_ref = cat.reshape(H_, H_, E_)
    ref = (LAMBD / E_) * (
        jnp.abs(c3_ref[1:] - c3_ref[:-1]).sum()
        + jnp.abs(c3_ref[:, 1:] - c3_ref[:, :-1]).sum()
    )
    ref = jax.block_until_ready(ref)

    assert loss.shape == ()
    assert bool(jnp.isfinite(loss))
    assert jnp.allclose(loss, ref, rtol=2e-3, atol=1e-5), (float(loss), float(ref))

    # coef is None -> zero loss, same as the torch module.
    zero = jax.block_until_ready(tv_mixture_loss(batch, output, {"coef": None}))
    assert zero.shape == () and float(zero) == 0.0

    print("KERNEL_OK")
</pallas_src>

<mosaic_0001>
module attributes {stable_mosaic.version = 11 : i64} {
  func.func @_tv_mixture_kernel(%arg0: memref<16x16x128xf32, #tpu.memory_space<vmem>>, %arg1: memref<16x2048xf32, #tpu.memory_space<vmem>>, %arg2: memref<1x1xf32, #tpu.memory_space<smem>>) attributes {dimension_semantics = [], scalar_prefetch = 0 : i64, scratch_operands = 0 : i64, tpu.core_type = #tpu.core_type<tc>} {
    %cst = arith.constant 0.000000e+00 : f32
    %0 = vector.broadcast %cst : f32 to vector<16x128xf32>
    %c0 = arith.constant 0 : index
    %c0_0 = arith.constant 0 : index
    %c0_1 = arith.constant 0 : index
    %1 = vector.load %arg0[%c0, %c0_0, %c0_1] : memref<16x16x128xf32, #tpu.memory_space<vmem>>, vector<1x16x128xf32>
    %2 = vector.shape_cast %1 : vector<1x16x128xf32> to vector<16x128xf32>
    %c1 = arith.constant 1 : index
    %c0_2 = arith.constant 0 : index
    %c0_3 = arith.constant 0 : index
    %3 = vector.load %arg0[%c1, %c0_2, %c0_3] : memref<16x16x128xf32, #tpu.memory_space<vmem>>, vector<1x16x128xf32>
    %4 = vector.shape_cast %3 : vector<1x16x128xf32> to vector<16x128xf32>
    %5 = arith.subf %4, %2 : vector<16x128xf32>
    %6 = math.absf %5 : vector<16x128xf32>
    %7 = arith.addf %0, %6 : vector<16x128xf32>
    %c2 = arith.constant 2 : index
    %c0_4 = arith.constant 0 : index
    %c0_5 = arith.constant 0 : index
    %8 = vector.load %arg0[%c2, %c0_4, %c0_5] : memref<16x16x128xf32, #tpu.memory_space<vmem>>, vector<1x16x128xf32>
    %9 = vector.shape_cast %8 : vector<1x16x128xf32> to vector<16x128xf32>
    %10 = arith.subf %9, %4 : vector<16x128xf32>
    %11 = math.absf %10 : vector<16x128xf32>
    %12 = arith.addf %7, %11 : vector<16x128xf32>
    %c3 = arith.constant 3 : index
    %c0_6 = arith.constant 0 : index
    %c0_7 = arith.constant 0 : index
    %13 = vector.load %arg0[%c3, %c0_6, %c0_7] : memref<16x16x128xf32, #tpu.memory_space<vmem>>, vector<1x16x128xf32>
    %14 = vector.shape_cast %13 : vector<1x16x128xf32> to vector<16x128xf32>
    %15 = arith.subf %14, %9 : vector<16x128xf32>
    %16 = math.absf %15 : vector<16x128xf32>
    %17 = arith.addf %12, %16 : vector<16x128xf32>
    %c4 = arith.constant 4 : index
    %c0_8 = arith.constant 0 : index
    %c0_9 = arith.constant 0 : index
    %18 = vector.load %arg0[%c4, %c0_8, %c0_9] : memref<16x16x128xf32, #tpu.memory_space<vmem>>, vector<1x16x128xf32>
    %19 = vector.shape_cast %18 : vector<1x16x128xf32> to vector<16x128xf32>
    %20 = arith.subf %19, %14 : vector<16x128xf32>
    %21 = math.absf %20 : vector<16x128xf32>
    %22 = arith.addf %17, %21 : vector<16x128xf32>
    %c5 = arith.constant 5 : index
    %c0_10 = arith.constant 0 : index
    %c0_11 = arith.constant 0 : index
    %23 = vector.load %arg0[%c5, %c0_10, %c0_11] : memref<16x16x128xf32, #tpu.memory_space<vmem>>, vector<1x16x128xf32>
    %24 = vector.shape_cast %23 : vector<1x16x128xf32> to vector<16x128xf32>
    %25 = arith.subf %24, %19 : vector<16x128xf32>
    %26 = math.absf %25 : vector<16x128xf32>
    %27 = arith.addf %22, %26 : vector<16x128xf32>
    %c6 = arith.constant 6 : index
    %c0_12 = arith.constant 0 : index
    %c0_13 = arith.constant 0 : index
    %28 = vector.load %arg0[%c6, %c0_12, %c0_13] : memref<16x16x128xf32, #tpu.memory_space<vmem>>, vector<1x16x128xf32>
    %29 = vector.shape_cast %28 : vector<1x16x128xf32> to vector<16x128xf32>
    %30 = arith.subf %29, %24 : vector<16x128xf32>
    %31 = math.absf %30 : vector<16x128xf32>
    %32 = arith.addf %27, %31 : vector<16x128xf32>
    %c7 = arith.constant 7 : index
    %c0_14 = arith.constant 0 : index
    %c0_15 = arith.constant 0 : index
    %33 = vector.load %arg0[%c7, %c0_14, %c0_15] : memref<16x16x128xf32, #tpu.memory_space<vmem>>, vector<1x16x128xf32>
    %34 = vector.shape_cast %33 : vector<1x16x128xf32> to vector<16x128xf32>
    %35 = arith.subf %34, %29 : vector<16x128xf32>
    %36 = math.absf %35 : vector<16x128xf32>
    %37 = arith.addf %32, %36 : vector<16x128xf32>
    %c8 = arith.constant 8 : index
    %c0_16 = arith.constant 0 : index
    %c0_17 = arith.constant 0 : index
    %38 = vector.load %arg0[%c8, %c0_16, %c0_17] : memref<16x16x128xf32, #tpu.memory_space<vmem>>, vector<1x16x128xf32>
    %39 = vector.shape_cast %38 : vector<1x16x128xf32> to vector<16x128xf32>
    %40 = arith.subf %39, %34 : vector<16x128xf32>
    %41 = math.absf %40 : vector<16x128xf32>
    %42 = arith.addf %37, %41 : vector<16x128xf32>
    %c9 = arith.constant 9 : index
    %c0_18 = arith.constant 0 : index
    %c0_19 = arith.constant 0 : index
    %43 = vector.load %arg0[%c9, %c0_18, %c0_19] : memref<16x16x128xf32, #tpu.memory_space<vmem>>, vector<1x16x128xf32>
    %44 = vector.shape_cast %43 : vector<1x16x128xf32> to vector<16x128xf32>
    %45 = arith.subf %44, %39 : vector<16x128xf32>
    %46 = math.absf %45 : vector<16x128xf32>
    %47 = arith.addf %42, %46 : vector<16x128xf32>
    %c10 = arith.constant 10 : index
    %c0_20 = arith.constant 0 : index
    %c0_21 = arith.constant 0 : index
    %48 = vector.load %arg0[%c10, %c0_20, %c0_21] : memref<16x16x128xf32, #tpu.memory_space<vmem>>, vector<1x16x128xf32>
    %49 = vector.shape_cast %48 : vector<1x16x128xf32> to vector<16x128xf32>
    %50 = arith.subf %49, %44 : vector<16x128xf32>
    %51 = math.absf %50 : vector<16x128xf32>
    %52 = arith.addf %47, %51 : vector<16x128xf32>
    %c11 = arith.constant 11 : index
    %c0_22 = arith.constant 0 : index
    %c0_23 = arith.constant 0 : index
    %53 = vector.load %arg0[%c11, %c0_22, %c0_23] : memref<16x16x128xf32, #tpu.memory_space<vmem>>, vector<1x16x128xf32>
    %54 = vector.shape_cast %53 : vector<1x16x128xf32> to vector<16x128xf32>
    %55 = arith.subf %54, %49 : vector<16x128xf32>
    %56 = math.absf %55 : vector<16x128xf32>
    %57 = arith.addf %52, %56 : vector<16x128xf32>
    %c12 = arith.constant 12 : index
    %c0_24 = arith.constant 0 : index
    %c0_25 = arith.constant 0 : index
    %58 = vector.load %arg0[%c12, %c0_24, %c0_25] : memref<16x16x128xf32, #tpu.memory_space<vmem>>, vector<1x16x128xf32>
    %59 = vector.shape_cast %58 : vector<1x16x128xf32> to vector<16x128xf32>
    %60 = arith.subf %59, %54 : vector<16x128xf32>
    %61 = math.absf %60 : vector<16x128xf32>
    %62 = arith.addf %57, %61 : vector<16x128xf32>
    %c13 = arith.constant 13 : index
    %c0_26 = arith.constant 0 : index
    %c0_27 = arith.constant 0 : index
    %63 = vector.load %arg0[%c13, %c0_26, %c0_27] : memref<16x16x128xf32, #tpu.memory_space<vmem>>, vector<1x16x128xf32>
    %64 = vector.shape_cast %63 : vector<1x16x128xf32> to vector<16x128xf32>
    %65 = arith.subf %64, %59 : vector<16x128xf32>
    %66 = math.absf %65 : vector<16x128xf32>
    %67 = arith.addf %62, %66 : vector<16x128xf32>
    %c14 = arith.constant 14 : index
    %c0_28 = arith.constant 0 : index
    %c0_29 = arith.constant 0 : index
    %68 = vector.load %arg0[%c14, %c0_28, %c0_29] : memref<16x16x128xf32, #tpu.memory_space<vmem>>, vector<1x16x128xf32>
    %69 = vector.shape_cast %68 : vector<1x16x128xf32> to vector<16x128xf32>
    %70 = arith.subf %69, %64 : vector<16x128xf32>
    %71 = math.absf %70 : vector<16x128xf32>
    %72 = arith.addf %67, %71 : vector<16x128xf32>
    %c15 = arith.constant 15 : index
    %c0_30 = arith.constant 0 : index
    %c0_31 = arith.constant 0 : index
    %73 = vector.load %arg0[%c15, %c0_30, %c0_31] : memref<16x16x128xf32, #tpu.memory_space<vmem>>, vector<1x16x128xf32>
    %74 = vector.shape_cast %73 : vector<1x16x128xf32> to vector<16x128xf32>
    %75 = arith.subf %74, %69 : vector<16x128xf32>
    %76 = math.absf %75 : vector<16x128xf32>
    %77 = arith.addf %72, %76 : vector<16x128xf32>
    %c0_32 = arith.constant 0 : index
    %c0_33 = arith.constant 0 : index
    %78 = vector.load %arg1[%c0_32, %c0_33] : memref<16x2048xf32, #tpu.memory_space<vmem>>, vector<16x128xf32>
    %c0_34 = arith.constant 0 : index
    %c128 = arith.constant 128 : index
    %79 = vector.load %arg1[%c0_34, %c128] : memref<16x2048xf32, #tpu.memory_space<vmem>>, vector<16x128xf32>
    %80 = arith.subf %79, %78 : vector<16x128xf32>
    %81 = math.absf %80 : vector<16x128xf32>
    %82 = arith.addf %77, %81 : vector<16x128xf32>
    %c0_35 = arith.constant 0 : index
    %c256 = arith.constant 256 : index
    %83 = vector.load %arg1[%c0_35, %c256] : memref<16x2048xf32, #tpu.memory_space<vmem>>, vector<16x128xf32>
    %84 = arith.subf %83, %79 : vector<16x128xf32>
    %85 = math.absf %84 : vector<16x128xf32>
    %86 = arith.addf %82, %85 : vector<16x128xf32>
    %c0_36 = arith.constant 0 : index
    %c384 = arith.constant 384 : index
    %87 = vector.load %arg1[%c0_36, %c384] : memref<16x2048xf32, #tpu.memory_space<vmem>>, vector<16x128xf32>
    %88 = arith.subf %87, %83 : vector<16x128xf32>
    %89 = math.absf %88 : vector<16x128xf32>
    %90 = arith.addf %86, %89 : vector<16x128xf32>
    %c0_37 = arith.constant 0 : index
    %c512 = arith.constant 512 : index
    %91 = vector.load %arg1[%c0_37, %c512] : memref<16x2048xf32, #tpu.memory_space<vmem>>, vector<16x128xf32>
    %92 = arith.subf %91, %87 : vector<16x128xf32>
    %93 = math.absf %92 : vector<16x128xf32>
    %94 = arith.addf %90, %93 : vector<16x128xf32>
    %c0_38 = arith.constant 0 : index
    %c640 = arith.constant 640 : index
    %95 = vector.load %arg1[%c0_38, %c640] : memref<16x2048xf32, #tpu.memory_space<vmem>>, vector<16x128xf32>
    %96 = arith.subf %95, %91 : vector<16x128xf32>
    %97 = math.absf %96 : vector<16x128xf32>
    %98 = arith.addf %94, %97 : vector<16x128xf32>
    %c0_39 = arith.constant 0 : index
    %c768 = arith.constant 768 : index
    %99 = vector.load %arg1[%c0_39, %c768] : memref<16x2048xf32, #tpu.memory_space<vmem>>, vector<16x128xf32>
    %100 = arith.subf %99, %95 : vector<16x128xf32>
    %101 = math.absf %100 : vector<16x128xf32>
    %102 = arith.addf %98, %101 : vector<16x128xf32>
    %c0_40 = arith.constant 0 : index
    %c896 = arith.constant 896 : index
    %103 = vector.load %arg1[%c0_40, %c896] : memref<16x2048xf32, #tpu.memory_space<vmem>>, vector<16x128xf32>
    %104 = arith.subf %103, %99 : vector<16x128xf32>
    %105 = math.absf %104 : vector<16x128xf32>
    %106 = arith.addf %102, %105 : vector<16x128xf32>
    %c0_41 = arith.constant 0 : index
    %c1024 = arith.constant 1024 : index
    %107 = vector.load %arg1[%c0_41, %c1024] : memref<16x2048xf32, #tpu.memory_space<vmem>>, vector<16x128xf32>
    %108 = arith.subf %107, %103 : vector<16x128xf32>
    %109 = math.absf %108 : vector<16x128xf32>
    %110 = arith.addf %106, %109 : vector<16x128xf32>
    %c0_42 = arith.constant 0 : index
    %c1152 = arith.constant 1152 : index
    %111 = vector.load %arg1[%c0_42, %c1152] : memref<16x2048xf32, #tpu.memory_space<vmem>>, vector<16x128xf32>
    %112 = arith.subf %111, %107 : vector<16x128xf32>
    %113 = math.absf %112 : vector<16x128xf32>
    %114 = arith.addf %110, %113 : vector<16x128xf32>
    %c0_43 = arith.constant 0 : index
    %c1280 = arith.constant 1280 : index
    %115 = vector.load %arg1[%c0_43, %c1280] : memref<16x2048xf32, #tpu.memory_space<vmem>>, vector<16x128xf32>
    %116 = arith.subf %115, %111 : vector<16x128xf32>
    %117 = math.absf %116 : vector<16x128xf32>
    %118 = arith.addf %114, %117 : vector<16x128xf32>
    %c0_44 = arith.constant 0 : index
    %c1408 = arith.constant 1408 : index
    %119 = vector.load %arg1[%c0_44, %c1408] : memref<16x2048xf32, #tpu.memory_space<vmem>>, vector<16x128xf32>
    %120 = arith.subf %119, %115 : vector<16x128xf32>
    %121 = math.absf %120 : vector<16x128xf32>
    %122 = arith.addf %118, %121 : vector<16x128xf32>
    %c0_45 = arith.constant 0 : index
    %c1536 = arith.constant 1536 : index
    %123 = vector.load %arg1[%c0_45, %c1536] : memref<16x2048xf32, #tpu.memory_space<vmem>>, vector<16x128xf32>
    %124 = arith.subf %123, %119 : vector<16x128xf32>
    %125 = math.absf %124 : vector<16x128xf32>
    %126 = arith.addf %122, %125 : vector<16x128xf32>
    %c0_46 = arith.constant 0 : index
    %c1664 = arith.constant 1664 : index
    %127 = vector.load %arg1[%c0_46, %c1664] : memref<16x2048xf32, #tpu.memory_space<vmem>>, vector<16x128xf32>
    %128 = arith.subf %127, %123 : vector<16x128xf32>
    %129 = math.absf %128 : vector<16x128xf32>
    %130 = arith.addf %126, %129 : vector<16x128xf32>
    %c0_47 = arith.constant 0 : index
    %c1792 = arith.constant 1792 : index
    %131 = vector.load %arg1[%c0_47, %c1792] : memref<16x2048xf32, #tpu.memory_space<vmem>>, vector<16x128xf32>
    %132 = arith.subf %131, %127 : vector<16x128xf32>
    %133 = math.absf %132 : vector<16x128xf32>
    %134 = arith.addf %130, %133 : vector<16x128xf32>
    %c0_48 = arith.constant 0 : index
    %c1920 = arith.constant 1920 : index
    %135 = vector.load %arg1[%c0_48, %c1920] : memref<16x2048xf32, #tpu.memory_space<vmem>>, vector<16x128xf32>
    %136 = arith.subf %135, %131 : vector<16x128xf32>
    %137 = math.absf %136 : vector<16x128xf32>
    %138 = arith.addf %134, %137 : vector<16x128xf32>
    %139 = vector.shape_cast %138 : vector<16x128xf32> to vector<1x16x128xf32>
    %cst_49 = arith.constant dense<0.000000e+00> : vector<1xf32>
    %140 = vector.multi_reduction <add>, %139, %cst_49 [1, 2] : vector<1x16x128xf32> to vector<1xf32>
    %141 = vector.shape_cast %140 : vector<1xf32> to vector<1x1x1xf32>
    %142 = vector.extract %141[0, 0, 0] : f32 from vector<1x1x1xf32>
    %cst_50 = arith.constant 7.812500e-06 : f32
    %143 = arith.mulf %cst_50, %142 : f32
    %c0_51 = arith.constant 0 : index
    %c0_52 = arith.constant 0 : index
    %144 = memref.load %arg2[%c0_51, %c0_52] : memref<1x1xf32, #tpu.memory_space<smem>>
    memref.store %143, %arg2[%c0_51, %c0_52] : memref<1x1xf32, #tpu.memory_space<smem>>
    return
  }
}

</mosaic_0001>

<llo_original>
// kernel: tpu_custom_call.1
$region0: #{tpu_custom_call.1}
  #allocation0 [shape = 'u32[]', space=smem, size = 0x4, offset = 0x4, fixed_abs, tag = 'smem constant byte address 0x4 - core index']
  #allocation1 [shape = 'u32[72,128]{1,0:T(1,128)}', space=vmem, size = 0x9000, scoped, tag = 'internal scratch']
  %s0 = inlined_call_operand.hbm [shape: f32[16,16,128], index: 0, kind: input, shape index: {}]
  %s1 = inlined_call_operand.hbm [shape: f32[16,2048], index: 1, kind: input, shape index: {}]
  %s2 = inlined_call_operand.hbm [shape: f32[1,1], index: 2, kind: output, shape index: {}]
  %s3 = sld [smem:[#allocation0]]
  $region26: #{tpu_custom_call.1} parent=0
    _
  %s5 = ssub.s32 1, %s3
  %s6 = scalar_select 0, %s5, %s3
  $region1: #{tpu_custom_call.1} parent=0
    #allocation2 [shape = 'u8[131072]{0}', space=vmem, size = 0x20000, scoped, tag = 'input window, operand 0, single buffered']
    #allocation3 [shape = 's32[1]{0}', space=sflag, size = 0x4, scoped, tag = 'scoped memory for tpu_custom_call.1']
    #allocation4 [shape = 's32[1]{0}', space=sflag, size = 0x4, scoped, tag = 'scoped memory for tpu_custom_call.1']
    #allocation5 [shape = 'u8[131072]{0}', space=vmem, size = 0x20000, scoped, tag = 'input window, operand 1, single buffered']
    #allocation6 [shape = 's32[1]{0}', space=sflag, size = 0x4, scoped, tag = 'scoped memory for tpu_custom_call.1']
    #allocation7 [shape = 'u8[512]{0}', space=smem, size = 0x200, scoped, tag = 'output window, operand 0, single buffered']
    %7 = vsyncpa [#allocation3], 0
    %8 = vsyncpa [#allocation6], 0
    %9 = vsyncpa [#allocation4], 0
    // Predicated region
    $region2: #{tpu_custom_call.1} parent=1 // pred_check
      _
    $region3: #{tpu_custom_call.1} parent=1 // pred_check_branch
      %11 = sbr.rel (0) target = $region5
    $region4: #{tpu_custom_call.1} parent=1 // pred_region
      %13 = vsyncadd [#allocation3], 0
      %s14 = sshll.u32 %s0, 4
      %s15 = int_to_ptr.hbm [resolvable:$true] %s14
      %s16 = sshll.u32 [#allocation2], 4
      %s17 = int_to_ptr.vmem [resolvable:$true] %s16
      %22 = dma.hbm_to_vmem [thread:$0]  %s15, 4096, %s17, [#allocation3], 128, 128, 8
    $region5: #{tpu_custom_call.1} parent=1 // pred_fallthru
      _
    // Predicated region
    $region6: #{tpu_custom_call.1} parent=1 // pred_check
      _
    $region7: #{tpu_custom_call.1} parent=1 // pred_check_branch
      %24 = sbr.rel (0) target = $region9
    $region8: #{tpu_custom_call.1} parent=1 // pred_region
      %26 = vsyncadd [#allocation6], 0
      %s27 = sshll.u32 %s1, 4
      %s28 = int_to_ptr.hbm [resolvable:$true] %s27
      %s29 = sshll.u32 [#allocation5], 4
      %s30 = int_to_ptr.vmem [resolvable:$true] %s29
      %35 = dma.hbm_to_vmem [thread:$0]  %s28, 4096, %s30, [#allocation6], 2048, 2048, 128
    $region9: #{tpu_custom_call.1} parent=1 // pred_fallthru
      _
    // Predicated region
    $region10: #{tpu_custom_call.1} parent=1 // pred_check
      _
    $region11: #{tpu_custom_call.1} parent=1 // pred_check_branch
      %37 = sbr.rel (0) target = $region13
    $region12: #{tpu_custom_call.1} parent=1 // pred_region
      %39 = dma.done [#allocation3], 4096
    $region13: #{tpu_custom_call.1} parent=1 // pred_fallthru
      _
    // Predicated region
    $region14: #{tpu_custom_call.1} parent=1 // pred_check
      _
    $region15: #{tpu_custom_call.1} parent=1 // pred_check_branch
      %41 = sbr.rel (0) target = $region17
    $region16: #{tpu_custom_call.1} parent=1 // pred_region
      %43 = dma.done [#allocation6], 4096
    $region17: #{tpu_custom_call.1} parent=1 // pred_fallthru
      _
    %v44 = vld [vmem:[#allocation2] sm:$0xff]
    %v45 = vld [vmem:[#allocation2 + $0x8] sm:$0xff]
    %s46 = scalar_lea.vmem [#allocation2], 16
    %v47 = vld [vmem:[%s46] sm:$0xff]
    %v48 = vld [vmem:[%s46 + $0x8] sm:$0xff]
    %v49 = vsub.f32 %v47, %v44
    %v50 = vsub.f32 %v48, %v45
    %v51 = vand.u32 2147483647, %v49
    %v52 = vand.u32 2147483647, %v50
    %v53 = vadd.f32 %v51, 0.0
    %v54 = vadd.f32 %v52, 0.0
    %s55 = scalar_lea.vmem [#allocation2], 32
    %v56 = vld [vmem:[%s55] sm:$0xff]
    %v57 = vld [vmem:[%s55 + $0x8] sm:$0xff]
    %v58 = vsub.f32 %v56, %v47
    %v59 = vsub.f32 %v57, %v48
    %v60 = vand.u32 2147483647, %v58
    %v61 = vand.u32 2147483647, %v59
    %v62 = vadd.f32 %v53, %v60
    %v63 = vadd.f32 %v54, %v61
    %s64 = scalar_lea.vmem [#allocation2], 48
    %v65 = vld [vmem:[%s64] sm:$0xff]
    %v66 = vld [vmem:[%s64 + $0x8] sm:$0xff]
    %v67 = vsub.f32 %v65, %v56
    %v68 = vsub.f32 %v66, %v57
    %v69 = vand.u32 2147483647, %v67
    %v70 = vand.u32 2147483647, %v68
    %v71 = vadd.f32 %v62, %v69
    %v72 = vadd.f32 %v63, %v70
    %s73 = scalar_lea.vmem [#allocation2], 64
    %v74 = vld [vmem:[%s73] sm:$0xff]
    %v75 = vld [vmem:[%s73 + $0x8] sm:$0xff]
    %v76 = vsub.f32 %v74, %v65
    %v77 = vsub.f32 %v75, %v66
    %v78 = vand.u32 2147483647, %v76
    %v79 = vand.u32 2147483647, %v77
    %v80 = vadd.f32 %v71, %v78
    %v81 = vadd.f32 %v72, %v79
    %s82 = scalar_lea.vmem [#allocation2], 80
    %v83 = vld [vmem:[%s82] sm:$0xff]
    %v84 = vld [vmem:[%s82 + $0x8] sm:$0xff]
    %v85 = vsub.f32 %v83, %v74
    %v86 = vsub.f32 %v84, %v75
    %v87 = vand.u32 2147483647, %v85
    %v88 = vand.u32 2147483647, %v86
    %v89 = vadd.f32 %v80, %v87
    %v90 = vadd.f32 %v81, %v88
    %s91 = scalar_lea.vmem [#allocation2], 96
    %v92 = vld [vmem:[%s91] sm:$0xff]
    %v93 = vld [vmem:[%s91 + $0x8] sm:$0xff]
    %v94 = vsub.f32 %v92, %v83
    %v95 = vsub.f32 %v93, %v84
    %v96 = vand.u32 2147483647, %v94
    %v97 = vand.u32 2147483647, %v95
    %v98 = vadd.f32 %v89, %v96
    %v99 = vadd.f32 %v90, %v97
    %s100 = scalar_lea.vmem [#allocation2], 112
    %v101 = vld [vmem:[%s100] sm:$0xff]
    %v102 = vld [vmem:[%s100 + $0x8] sm:$0xff]
    %v103 = vsub.f32 %v101, %v92
    %v104 = vsub.f32 %v102, %v93
    %v105 = vand.u32 2147483647, %v103
    %v106 = vand.u32 2147483647, %v104
    %v107 = vadd.f32 %v98, %v105
    %v108 = vadd.f32 %v99, %v106
    %s109 = scalar_lea.vmem [#allocation2], 128
    %v110 = vld [vmem:[%s109] sm:$0xff]
    %v111 = vld [vmem:[%s109 + $0x8] sm:$0xff]
    %v112 = vsub.f32 %v110, %v101
    %v113 = vsub.f32 %v111, %v102
    %v114 = vand.u32 2147483647, %v112
    %v115 = vand.u32 2147483647, %v113
    %v116 = vadd.f32 %v107, %v114
    %v117 = vadd.f32 %v108, %v115
    %s118 = scalar_lea.vmem [#allocation2], 144
    %v119 = vld [vmem:[%s118] sm:$0xff]
    %v120 = vld [vmem:[%s118 + $0x8] sm:$0xff]
    %v121 = vsub.f32 %v119, %v110
    %v122 = vsub.f32 %v120, %v111
    %v123 = vand.u32 2147483647, %v121
    %v124 = vand.u32 2147483647, %v122
    %v125 = vadd.f32 %v116, %v123
    %v126 = vadd.f32 %v117, %v124
    %s127 = scalar_lea.vmem [#allocation2], 160
    %v128 = vld [vmem:[%s127] sm:$0xff]
    %v129 = vld [vmem:[%s127 + $0x8] sm:$0xff]
    %v130 = vsub.f32 %v128, %v119
    %v131 = vsub.f32 %v129, %v120
    %v132 = vand.u32 2147483647, %v130
    %v133 = vand.u32 2147483647, %v131
    %v134 = vadd.f32 %v125, %v132
    %v135 = vadd.f32 %v126, %v133
    %s136 = scalar_lea.vmem [#allocation2], 176
    %v137 = vld [vmem:[%s136] sm:$0xff]
    %v138 = vld [vmem:[%s136 + $0x8] sm:$0xff]
    %v139 = vsub.f32 %v137, %v128
    %v140 = vsub.f32 %v138, %v129
    %v141 = vand.u32 2147483647, %v139
    %v142 = vand.u32 2147483647, %v140
    %v143 = vadd.f32 %v134, %v141
    %v144 = vadd.f32 %v135, %v142
    %s145 = scalar_lea.vmem [#allocation2], 192
    %v146 = vld [vmem:[%s145] sm:$0xff]
    %v147 = vld [vmem:[%s145 + $0x8] sm:$0xff]
    %v148 = vsub.f32 %v146, %v137
    %v149 = vsub.f32 %v147, %v138
    %v150 = vand.u32 2147483647, %v148
    %v151 = vand.u32 2147483647, %v149
    %v152 = vadd.f32 %v143, %v150
    %v153 = vadd.f32 %v144, %v151
    %s154 = scalar_lea.vmem [#allocation2], 208
    %v155 = vld [vmem:[%s154] sm:$0xff]
    %v156 = vld [vmem:[%s154 + $0x8] sm:$0xff]
    %v157 = vsub.f32 %v155, %v146
    %v158 = vsub.f32 %v156, %v147
    %v159 = vand.u32 2147483647, %v157
    %v160 = vand.u32 2147483647, %v158
    %v161 = vadd.f32 %v152, %v159
    %v162 = vadd.f32 %v153, %v160
    %s163 = scalar_lea.vmem [#allocation2], 224
    %v164 = vld [vmem:[%s163] sm:$0xff]
    %v165 = vld [vmem:[%s163 + $0x8] sm:$0xff]
    %v166 = vsub.f32 %v164, %v155
    %v167 = vsub.f32 %v165, %v156
    %v168 = vand.u32 2147483647, %v166
    %v169 = vand.u32 2147483647, %v167
    %v170 = vadd.f32 %v161, %v168
    %v171 = vadd.f32 %v162, %v169
    %s172 = scalar_lea.vmem [#allocation2], 240
    %v173 = vld [vmem:[%s172] sm:$0xff]
    %v174 = vld [vmem:[%s172 + $0x8] sm:$0xff]
    %v175 = vsub.f32 %v173, %v164
    %v176 = vsub.f32 %v174, %v165
    %v177 = vand.u32 2147483647, %v175
    %v178 = vand.u32 2147483647, %v176
    %v179 = vadd.f32 %v170, %v177
    %v180 = vadd.f32 %v171, %v178
    %v181 = vld [vmem:[#allocation5] sm:$0xff]
    %v182 = vld [vmem:[#allocation5 + $0x80] sm:$0xff]
    %v183 = vld [vmem:[#allocation5 + $0x8] sm:$0xff]
    %v184 = vld [vmem:[#allocation5 + $0x88] sm:$0xff]
    %v185 = vsub.f32 %v183, %v181
    %v186 = vsub.f32 %v184, %v182
    %v187 = vand.u32 2147483647, %v185
    %v188 = vand.u32 2147483647, %v186
    %v189 = vadd.f32 %v179, %v187
    %v190 = vadd.f32 %v180, %v188
    %v191 = vld [vmem:[#allocation5 + $0x10] sm:$0xff]
    %v192 = vld [vmem:[#allocation5 + $0x90] sm:$0xff]
    %v193 = vsub.f32 %v191, %v183
    %v194 = vsub.f32 %v192, %v184
    %v195 = vand.u32 2147483647, %v193
    %v196 = vand.u32 2147483647, %v194
    %v197 = vadd.f32 %v189, %v195
    %v198 = vadd.f32 %v190, %v196
    %v199 = vld [vmem:[#allocation5 + $0x18] sm:$0xff]
    %v200 = vld [vmem:[#allocation5 + $0x98] sm:$0xff]
    %v201 = vsub.f32 %v199, %v191
    %v202 = vsub.f32 %v200, %v192
    %v203 = vand.u32 2147483647, %v201
    %v204 = vand.u32 2147483647, %v202
    %v205 = vadd.f32 %v197, %v203
    %v206 = vadd.f32 %v198, %v204
    %v207 = vld [vmem:[#allocation5 + $0x20] sm:$0xff]
    %v208 = vld [vmem:[#allocation5 + $0xa0] sm:$0xff]
    %v209 = vsub.f32 %v207, %v199
    %v210 = vsub.f32 %v208, %v200
    %v211 = vand.u32 2147483647, %v209
    %v212 = vand.u32 2147483647, %v210
    %v213 = vadd.f32 %v205, %v211
    %v214 = vadd.f32 %v206, %v212
    %v215 = vld [vmem:[#allocation5 + $0x28] sm:$0xff]
    %v216 = vld [vmem:[#allocation5 + $0xa8] sm:$0xff]
    %v217 = vsub.f32 %v215, %v207
    %v218 = vsub.f32 %v216, %v208
    %v219 = vand.u32 2147483647, %v217
    %v220 = vand.u32 2147483647, %v218
    %v221 = vadd.f32 %v213, %v219
    %v222 = vadd.f32 %v214, %v220
    %v223 = vld [vmem:[#allocation5 + $0x30] sm:$0xff]
    %v224 = vld [vmem:[#allocation5 + $0xb0] sm:$0xff]
    %v225 = vsub.f32 %v223, %v215
    %v226 = vsub.f32 %v224, %v216
    %v227 = vand.u32 2147483647, %v225
    %v228 = vand.u32 2147483647, %v226
    %v229 = vadd.f32 %v221, %v227
    %v230 = vadd.f32 %v222, %v228
    %v231 = vld [vmem:[#allocation5 + $0x38] sm:$0xff]
    %v232 = vld [vmem:[#allocation5 + $0xb8] sm:$0xff]
    %v233 = vsub.f32 %v231, %v223
    %v234 = vsub.f32 %v232, %v224
    %v235 = vand.u32 2147483647, %v233
    %v236 = vand.u32 2147483647, %v234
    %v237 = vadd.f32 %v229, %v235
    %v238 = vadd.f32 %v230, %v236
    %v239 = vld [vmem:[#allocation5 + $0x40] sm:$0xff]
    %v240 = vld [vmem:[#allocation5 + $0xc0] sm:$0xff]
    %v241 = vsub.f32 %v239, %v231
    %v242 = vsub.f32 %v240, %v232
    %v243 = vand.u32 2147483647, %v241
    %v244 = vand.u32 2147483647, %v242
    %v245 = vadd.f32 %v237, %v243
    %v246 = vadd.f32 %v238, %v244
    %v247 = vld [vmem:[#allocation5 + $0x48] sm:$0xff]
    %v248 = vld [vmem:[#allocation5 + $0xc8] sm:$0xff]
    %v249 = vsub.f32 %v247, %v239
    %v250 = vsub.f32 %v248, %v240
    %v251 = vand.u32 2147483647, %v249
    %v252 = vand.u32 2147483647, %v250
    %v253 = vadd.f32 %v245, %v251
    %v254 = vadd.f32 %v246, %v252
    %v255 = vld [vmem:[#allocation5 + $0x50] sm:$0xff]
    %v256 = vld [vmem:[#allocation5 + $0xd0] sm:$0xff]
    %v257 = vsub.f32 %v255, %v247
    %v258 = vsub.f32 %v256, %v248
    %v259 = vand.u32 2147483647, %v257
    %v260 = vand.u32 2147483647, %v258
    %v261 = vadd.f32 %v253, %v259
    %v262 = vadd.f32 %v254, %v260
    %v263 = vld [vmem:[#allocation5 + $0x58] sm:$0xff]
    %v264 = vld [vmem:[#allocation5 + $0xd8] sm:$0xff]
    %v265 = vsub.f32 %v263, %v255
    %v266 = vsub.f32 %v264, %v256
    %v267 = vand.u32 2147483647, %v265
    %v268 = vand.u32 2147483647, %v266
    %v269 = vadd.f32 %v261, %v267
    %v270 = vadd.f32 %v262, %v268
    %v271 = vld [vmem:[#allocation5 + $0x60] sm:$0xff]
    %v272 = vld [vmem:[#allocation5 + $0xe0] sm:$0xff]
    %v273 = vsub.f32 %v271, %v263
    %v274 = vsub.f32 %v272, %v264
    %v275 = vand.u32 2147483647, %v273
    %v276 = vand.u32 2147483647, %v274
    %v277 = vadd.f32 %v269, %v275
    %v278 = vadd.f32 %v270, %v276
    %v279 = vld [vmem:[#allocation5 + $0x68] sm:$0xff]
    %v280 = vld [vmem:[#allocation5 + $0xe8] sm:$0xff]
    %v281 = vsub.f32 %v279, %v271
    %v282 = vsub.f32 %v280, %v272
    %v283 = vand.u32 2147483647, %v281
    %v284 = vand.u32 2147483647, %v282
    %v285 = vadd.f32 %v277, %v283
    %v286 = vadd.f32 %v278, %v284
    %v287 = vld [vmem:[#allocation5 + $0x70] sm:$0xff]
    %v288 = vld [vmem:[#allocation5 + $0xf0] sm:$0xff]
    %v289 = vsub.f32 %v287, %v279
    %v290 = vsub.f32 %v288, %v280
    %v291 = vand.u32 2147483647, %v289
    %v292 = vand.u32 2147483647, %v290
    %v293 = vadd.f32 %v285, %v291
    %v294 = vadd.f32 %v286, %v292
    %v295 = vld [vmem:[#allocation5 + $0x78] sm:$0xff]
    %v296 = vld [vmem:[#allocation5 + $0xf8] sm:$0xff]
    %v297 = vsub.f32 %v295, %v287
    %v298 = vsub.f32 %v296, %v288
    %v299 = vand.u32 2147483647, %v297
    %v300 = vand.u32 2147483647, %v298
    %v301 = vadd.f32 %v293, %v299
    %v302 = vadd.f32 %v294, %v300
    %v303 = vadd.f32 %v301, %v302
    %304 = vadd.xlane.f32.xlu0 %v303
    %v305 = vpop.xlane.xlu0 %304
    %v306 = vrot.slane %v305, 4
    %v307 = vadd.f32 %v305, %v306
    %v308 = vrot.slane %v307, 2
    %v309 = vadd.f32 %v307, %v308
    %v310 = vrot.slane %v309, 1
    %v311 = vadd.f32 %v309, %v310
    %s312 = vtos %v311
    %s313 = smul.f32 %s312, 7.8125e-06
    %s314 = scalar_lea.smem [#allocation7], 0
    %315 = sst [smem:[%s314]] %s313
    // Predicated region
    $region18: #{tpu_custom_call.1} parent=1 // pred_check
      _
    $region19: #{tpu_custom_call.1} parent=1 // pred_check_branch
      %317 = sbr.rel (0) target = $region21
    $region20: #{tpu_custom_call.1} parent=1 // pred_region
      %319 = vsyncadd [#allocation4], 0
      %s321 = sshll.u32 %s2, 4
      %s322 = int_to_ptr.hbm [resolvable:$true] %s321
      %324 = dma.smem_to_hbm [#allocation7], 16, %s322, [#allocation4]
    $region21: #{tpu_custom_call.1} parent=1 // pred_fallthru
      _
    // Predicated region
    $region22: #{tpu_custom_call.1} parent=1 // pred_check
      _
    $region23: #{tpu_custom_call.1} parent=1 // pred_check_branch
      %326 = sbr.rel (0) target = $region25
    $region24: #{tpu_custom_call.1} parent=1 // pred_region
      %328 = dma.done [#allocation4], 16
    $region25: #{tpu_custom_call.1} parent=1 // pred_fallthru
      _
    %329 = sfence
    %330 = vsyncpa [#allocation3], 1
    %331 = vsyncpa [#allocation6], 1
    %332 = vsyncpa [#allocation4], 1

</llo_original>
